<compile_context>
chip_gen: v5e
topology: v5e:2x2
jax: 0.10.0
libtpu: 0.0.40
codegen_flags: <defaults>
</compile_context>

<pallas_src>
import jax
import jax.numpy as jnp
from jax.experimental import pallas as pl
from jax.experimental.pallas import tpu as pltpu


def _round_up(n, m):
    return ((n + m - 1) // m) * m


def _gelu_tanh(x):
    # tanh-form GELU: transcendental work goes to the EUP slot (free vs VALU).
    c = 0.7978845608028654  # sqrt(2/pi)
    return 0.5 * x * (1.0 + jnp.tanh(c * (x + 0.044715 * x * x * x)))


def _make_mlp_kernel(hidden_dims, layer_norm, eps=1e-5):
    """Fused kernel for the whole MLP; params resident, one batch tile per step."""
    num_hidden = len(hidden_dims)

    def kernel(*refs):
        x_ref = refs[0]
        out_ref = refs[-1]
        p = refs[1:-1]  # flat param refs (padded to 128-lane multiples)
        h = x_ref[...].astype(jnp.float32)
        i = 0
        for layer in range(num_hidden):
            w, b = p[i][...], p[i + 1][...]
            i += 2
            h = jnp.dot(h, w, preferred_element_type=jnp.float32) + b
            h = _gelu_tanh(h)
            if layer_norm:
                gamma, beta = p[i][...], p[i + 1][...]
                i += 2
                # Padded lanes of h are exactly 0, so sums over the padded width
                # equal sums over the logical features; normalize by logical n.
                inv_n = 1.0 / float(hidden_dims[layer])
                s1 = jnp.sum(h, axis=-1, keepdims=True)
                s2 = jnp.sum(h * h, axis=-1, keepdims=True)
                mu = s1 * inv_n
                var = s2 * inv_n - mu * mu
                h = (h - mu) * jax.lax.rsqrt(var + eps) * gamma + beta
        w, b = p[i][...], p[i + 1][...]
        out = jnp.dot(h, w, preferred_element_type=jnp.float32) + b
        out_ref[...] = out.astype(out_ref.dtype)

    return kernel


def init_mlp_params(key, input_dim, hidden_dims, output_dim, layer_norm):
    """Matches the PyTorch __init__: orthogonal(gain=1.0)+zero bias for hidden
    layers, orthogonal(gain=0.01)+zero bias for the final layer, LN gamma=1 beta=0.
    Weights stored transposed as (in, out) so the kernel computes h @ W + b."""
    flat = []
    prev = input_dim
    ortho1 = jax.nn.initializers.orthogonal(scale=1.0)
    for h in hidden_dims:
        key, sub = jax.random.split(key)
        w = ortho1(sub, (h, prev), jnp.float32).T          # (in, out)
        b = jnp.zeros((1, h), jnp.float32)
        flat += [w, b]
        if layer_norm:
            flat += [jnp.ones((1, h), jnp.float32), jnp.zeros((1, h), jnp.float32)]
        prev = h
    key, sub = jax.random.split(key)
    ortho_f = jax.nn.initializers.orthogonal(scale=0.01)
    wf = ortho_f(sub, (output_dim, prev), jnp.float32).T   # (in, out)
    bf = jnp.zeros((1, output_dim), jnp.float32)
    flat += [wf, bf]
    return flat


def _pad_params_lane_dense(flat, input_dim, hidden_dims, output_dim, layer_norm):
    """Zero-pad every feature dim to a multiple of 128 lanes.
    Padded weight cols/rows, biases, gamma and beta are all zero, so padded
    lanes of every intermediate activation stay exactly zero."""
    padded = []
    i = 0
    prev = input_dim
    for h in hidden_dims:
        w, b = flat[i], flat[i + 1]
        i += 2
        in_p, out_p = _round_up(prev, 128), _round_up(h, 128)
        padded.append(jnp.zeros((in_p, out_p), jnp.float32).at[:prev, :h].set(w))
        padded.append(jnp.zeros((1, out_p), jnp.float32).at[:, :h].set(b))
        if layer_norm:
            g, be = flat[i], flat[i + 1]
            i += 2
            padded.append(jnp.zeros((1, out_p), jnp.float32).at[:, :h].set(g))
            padded.append(jnp.zeros((1, out_p), jnp.float32).at[:, :h].set(be))
        prev = h
    w, b = flat[i], flat[i + 1]
    in_p, out_p = _round_up(prev, 128), _round_up(output_dim, 128)
    padded.append(jnp.zeros((in_p, out_p), jnp.float32).at[:prev, :output_dim].set(w))
    padded.append(jnp.zeros((1, out_p), jnp.float32).at[:, :output_dim].set(b))
    return padded


def mlp_forward(x, flat_params, hidden_dims, output_dim, layer_norm,
                tile_batch=256):
    """Pallas forward pass.  tile_batch: 256 suits v6e/v7x (2x256 MXU) and is a
    multiple of 128 for v5e; params + a double-buffered tile easily fit the
    32 MiB scoped VMEM limit (safe on v7x's 64 MiB physical VMEM)."""
    B, input_dim = x.shape
    in_p = _round_up(input_dim, 128)
    out_p = _round_up(output_dim, 128)

    padded_params = _pad_params_lane_dense(
        flat_params, input_dim, hidden_dims, output_dim, layer_norm)

    # Batch tile: full tile_batch when the batch is large, otherwise the batch
    # rounded up to a sublane multiple (8).
    TB = tile_batch if B >= tile_batch else _round_up(B, 8)
    grid_n = pl.cdiv(B, TB)
    B_p = grid_n * TB
    x_p = jnp.zeros((B_p, in_p), x.dtype).at[:B, :input_dim].set(x)

    kernel = _make_mlp_kernel(hidden_dims, layer_norm)

    in_specs = [pl.BlockSpec((TB, in_p), lambda i: (i, 0))]
    for prm in padded_params:
        # Constant block index across the grid -> param stays resident in VMEM.
        in_specs.append(pl.BlockSpec(prm.shape, lambda i: (0, 0)))

    out_padded = pl.pallas_call(
        kernel,
        out_shape=jax.ShapeDtypeStruct((B_p, out_p), x.dtype),
        grid=(grid_n,),
        in_specs=in_specs,
        out_specs=pl.BlockSpec((TB, out_p), lambda i: (i, 0)),
        compiler_params=pltpu.CompilerParams(
            dimension_semantics=("parallel",),      # batch tiles independent
            vmem_limit_bytes=32 * 1024 * 1024),
    )(x_p, *padded_params)

    return out_padded[:B, :output_dim]


def mlp_reference(x, flat_params, num_hidden, layer_norm, eps=1e-5,
                  exact_gelu=True):
    """Plain-JAX reference on the logical (unpadded) params."""
    h = x.astype(jnp.float32)
    i = 0
    for _ in range(num_hidden):
        w, b = flat_params[i], flat_params[i + 1]
        i += 2
        h = h @ w + b
        if exact_gelu:
            h = 0.5 * h * (1.0 + jax.scipy.special.erf(h * 0.7071067811865475))
        else:
            h = _gelu_tanh(h)
        if layer_norm:
            g, beta = flat_params[i], flat_params[i + 1]
            i += 2
            mu = jnp.mean(h, axis=-1, keepdims=True)
            var = jnp.mean((h - mu) ** 2, axis=-1, keepdims=True)
            h = (h - mu) * jax.lax.rsqrt(var + eps) * g + beta
    w, b = flat_params[i], flat_params[i + 1]
    return h @ w + b


if __name__ == "__main__":
    # Small, module-consistent shapes.
    batch, input_dim, output_dim = 8, 32, 8
    hidden_dims = [64, 64]
    layer_norm = True          # activate_final=False (module default)

    key = jax.random.PRNGKey(0)
    key, pkey, xkey = jax.random.split(key, 3)
    params = init_mlp_params(pkey, input_dim, hidden_dims, output_dim, layer_norm)
    x = jax.random.normal(xkey, (batch, input_dim), jnp.float32)

    out = mlp_forward(x, params, hidden_dims, output_dim, layer_norm)
    out = jax.block_until_ready(out)
    assert out.shape == (batch, output_dim)

    # Tight check vs a tanh-GELU reference (same math as the kernel).
    ref_tanh = mlp_reference(x, params, len(hidden_dims), layer_norm,
                             exact_gelu=False)
    assert jnp.allclose(out, ref_tanh, atol=1e-4, rtol=1e-4), \
        "mismatch vs tanh-GELU reference"

    # Documented-tolerance check vs exact-erf GELU (PyTorch nn.GELU() default):
    # the tanh approximation deviates by <= ~5e-4 per activation; after the
    # 0.01-gain final layer the end-to-end deviation is ~1e-4.
    ref_erf = mlp_reference(x, params, len(hidden_dims), layer_norm,
                            exact_gelu=True)
    assert jnp.allclose(out, ref_erf, atol=2e-3, rtol=2e-3), \
        "mismatch vs exact-erf reference"

    print("KERNEL_OK")
</pallas_src>

<mosaic_0001>
module attributes {stable_mosaic.version = 11 : i64} {
  func.func @kernel(%arg0: i32, %arg1: memref<8x128xf32, #tpu.memory_space<vmem>>, %arg2: memref<128x128xf32, #tpu.memory_space<vmem>>, %arg3: memref<1x128xf32, #tpu.memory_space<vmem>>, %arg4: memref<1x128xf32, #tpu.memory_space<vmem>>, %arg5: memref<1x128xf32, #tpu.memory_space<vmem>>, %arg6: memref<128x128xf32, #tpu.memory_space<vmem>>, %arg7: memref<1x128xf32, #tpu.memory_space<vmem>>, %arg8: memref<1x128xf32, #tpu.memory_space<vmem>>, %arg9: memref<1x128xf32, #tpu.memory_space<vmem>>, %arg10: memref<128x128xf32, #tpu.memory_space<vmem>>, %arg11: memref<1x128xf32, #tpu.memory_space<vmem>>, %arg12: memref<8x128xf32, #tpu.memory_space<vmem>>) attributes {dimension_semantics = [#tpu.dimension_semantics<parallel>], iteration_bounds = array<i64: 1>, scalar_prefetch = 0 : i64, scratch_operands = 0 : i64, tpu.core_type = #tpu.core_type<tc>, window_params = [{transform_indices = @transform_0, window_bounds = array<i64: 8, 128>}, {pipeline_mode = #tpu.pipeline_mode<synchronous>, transform_indices = @transform_1, window_bounds = array<i64: 128, 128>}, {pipeline_mode = #tpu.pipeline_mode<synchronous>, transform_indices = @transform_2, window_bounds = array<i64: 1, 128>}, {pipeline_mode = #tpu.pipeline_mode<synchronous>, transform_indices = @transform_3, window_bounds = array<i64: 1, 128>}, {pipeline_mode = #tpu.pipeline_mode<synchronous>, transform_indices = @transform_4, window_bounds = array<i64: 1, 128>}, {pipeline_mode = #tpu.pipeline_mode<synchronous>, transform_indices = @transform_5, window_bounds = array<i64: 128, 128>}, {pipeline_mode = #tpu.pipeline_mode<synchronous>, transform_indices = @transform_6, window_bounds = array<i64: 1, 128>}, {pipeline_mode = #tpu.pipeline_mode<synchronous>, transform_indices = @transform_7, window_bounds = array<i64: 1, 128>}, {pipeline_mode = #tpu.pipeline_mode<synchronous>, transform_indices = @transform_8, window_bounds = array<i64: 1, 128>}, {pipeline_mode = #tpu.pipeline_mode<synchronous>, transform_indices = @transform_9, window_bounds = array<i64: 128, 128>}, {pipeline_mode = #tpu.pipeline_mode<synchronous>, transform_indices = @transform_10, window_bounds = array<i64: 1, 128>}, {transform_indices = @transform_11, window_bounds = array<i64: 8, 128>}]} {
    %c0 = arith.constant 0 : index
    %c0_0 = arith.constant 0 : index
    %0 = vector.load %arg1[%c0, %c0_0] : memref<8x128xf32, #tpu.memory_space<vmem>>, vector<8x128xf32>
    %c0_1 = arith.constant 0 : index
    %c0_2 = arith.constant 0 : index
    %1 = vector.load %arg2[%c0_1, %c0_2] : memref<128x128xf32, #tpu.memory_space<vmem>>, vector<128x128xf32>
    %c0_3 = arith.constant 0 : index
    %c0_4 = arith.constant 0 : index
    %2 = vector.load %arg3[%c0_3, %c0_4] : memref<1x128xf32, #tpu.memory_space<vmem>>, vector<1x128xf32>
    %cst = arith.constant dense<0.000000e+00> : vector<8x128xf32>
    %3 = tpu.matmul %0, %1, %cst {dimension_numbers = #tpu.dot_dimension_numbers<[1], [0], [0], [1], [0, 0, 1, 1], [], []>} : vector<8x128xf32>, vector<128x128xf32>, vector<8x128xf32> -> vector<8x128xf32>
    %4 = vector.broadcast %2 : vector<1x128xf32> to vector<8x128xf32>
    %5 = arith.addf %3, %4 : vector<8x128xf32>
    %cst_5 = arith.constant 5.000000e-01 : f32
    %6 = vector.broadcast %cst_5 : f32 to vector<8x128xf32>
    %7 = arith.mulf %6, %5 : vector<8x128xf32>
    %cst_6 = arith.constant 4.471500e-02 : f32
    %8 = vector.broadcast %cst_6 : f32 to vector<8x128xf32>
    %9 = arith.mulf %8, %5 : vector<8x128xf32>
    %10 = arith.mulf %9, %5 : vector<8x128xf32>
    %11 = arith.mulf %10, %5 : vector<8x128xf32>
    %12 = arith.addf %5, %11 : vector<8x128xf32>
    %cst_7 = arith.constant 0.797884583 : f32
    %13 = vector.broadcast %cst_7 : f32 to vector<8x128xf32>
    %14 = arith.mulf %13, %12 : vector<8x128xf32>
    %15 = math.tanh %14 : vector<8x128xf32>
    %cst_8 = arith.constant 1.000000e+00 : f32
    %16 = vector.broadcast %cst_8 : f32 to vector<8x128xf32>
    %17 = arith.addf %16, %15 : vector<8x128xf32>
    %18 = arith.mulf %7, %17 : vector<8x128xf32>
    %c0_9 = arith.constant 0 : index
    %c0_10 = arith.constant 0 : index
    %19 = vector.load %arg4[%c0_9, %c0_10] : memref<1x128xf32, #tpu.memory_space<vmem>>, vector<1x128xf32>
    %c0_11 = arith.constant 0 : index
    %c0_12 = arith.constant 0 : index
    %20 = vector.load %arg5[%c0_11, %c0_12] : memref<1x128xf32, #tpu.memory_space<vmem>>, vector<1x128xf32>
    %cst_13 = arith.constant dense<0.000000e+00> : vector<8xf32>
    %21 = vector.multi_reduction <add>, %18, %cst_13 [1] : vector<8x128xf32> to vector<8xf32>
    %22 = vector.shape_cast %21 : vector<8xf32> to vector<8x1xf32>
    %23 = arith.mulf %18, %18 : vector<8x128xf32>
    %cst_14 = arith.constant dense<0.000000e+00> : vector<8xf32>
    %24 = vector.multi_reduction <add>, %23, %cst_14 [1] : vector<8x128xf32> to vector<8xf32>
    %25 = vector.shape_cast %24 : vector<8xf32> to vector<8x1xf32>
    %cst_15 = arith.constant 1.562500e-02 : f32
    %26 = vector.broadcast %cst_15 : f32 to vector<8x1xf32>
    %27 = arith.mulf %22, %26 : vector<8x1xf32>
    %cst_16 = arith.constant 1.562500e-02 : f32
    %28 = vector.broadcast %cst_16 : f32 to vector<8x1xf32>
    %29 = arith.mulf %25, %28 : vector<8x1xf32>
    %30 = arith.mulf %27, %27 : vector<8x1xf32>
    %31 = arith.subf %29, %30 : vector<8x1xf32>
    %32 = vector.broadcast %27 : vector<8x1xf32> to vector<8x128xf32>
    %33 = arith.subf %18, %32 : vector<8x128xf32>
    %cst_17 = arith.constant 9.99999974E-6 : f32
    %34 = vector.broadcast %cst_17 : f32 to vector<8x1xf32>
    %35 = arith.addf %31, %34 : vector<8x1xf32>
    %36 = math.rsqrt %35 : vector<8x1xf32>
    %37 = vector.broadcast %36 : vector<8x1xf32> to vector<8x128xf32>
    %38 = arith.mulf %33, %37 : vector<8x128xf32>
    %39 = vector.broadcast %19 : vector<1x128xf32> to vector<8x128xf32>
    %40 = arith.mulf %38, %39 : vector<8x128xf32>
    %41 = vector.broadcast %20 : vector<1x128xf32> to vector<8x128xf32>
    %42 = arith.addf %40, %41 : vector<8x128xf32>
    %c0_18 = arith.constant 0 : index
    %c0_19 = arith.constant 0 : index
    %43 = vector.load %arg6[%c0_18, %c0_19] : memref<128x128xf32, #tpu.memory_space<vmem>>, vector<128x128xf32>
    %c0_20 = arith.constant 0 : index
    %c0_21 = arith.constant 0 : index
    %44 = vector.load %arg7[%c0_20, %c0_21] : memref<1x128xf32, #tpu.memory_space<vmem>>, vector<1x128xf32>
    %cst_22 = arith.constant dense<0.000000e+00> : vector<8x128xf32>
    %45 = tpu.matmul %42, %43, %cst_22 {dimension_numbers = #tpu.dot_dimension_numbers<[1], [0], [0], [1], [0, 0, 1, 1], [], []>} : vector<8x128xf32>, vector<128x128xf32>, vector<8x128xf32> -> vector<8x128xf32>
    %46 = vector.broadcast %44 : vector<1x128xf32> to vector<8x128xf32>
    %47 = arith.addf %45, %46 : vector<8x128xf32>
    %cst_23 = arith.constant 5.000000e-01 : f32
    %48 = vector.broadcast %cst_23 : f32 to vector<8x128xf32>
    %49 = arith.mulf %48, %47 : vector<8x128xf32>
    %cst_24 = arith.constant 4.471500e-02 : f32
    %50 = vector.broadcast %cst_24 : f32 to vector<8x128xf32>
    %51 = arith.mulf %50, %47 : vector<8x128xf32>
    %52 = arith.mulf %51, %47 : vector<8x128xf32>
    %53 = arith.mulf %52, %47 : vector<8x128xf32>
    %54 = arith.addf %47, %53 : vector<8x128xf32>
    %cst_25 = arith.constant 0.797884583 : f32
    %55 = vector.broadcast %cst_25 : f32 to vector<8x128xf32>
    %56 = arith.mulf %55, %54 : vector<8x128xf32>
    %57 = math.tanh %56 : vector<8x128xf32>
    %cst_26 = arith.constant 1.000000e+00 : f32
    %58 = vector.broadcast %cst_26 : f32 to vector<8x128xf32>
    %59 = arith.addf %58, %57 : vector<8x128xf32>
    %60 = arith.mulf %49, %59 : vector<8x128xf32>
    %c0_27 = arith.constant 0 : index
    %c0_28 = arith.constant 0 : index
    %61 = vector.load %arg8[%c0_27, %c0_28] : memref<1x128xf32, #tpu.memory_space<vmem>>, vector<1x128xf32>
    %c0_29 = arith.constant 0 : index
    %c0_30 = arith.constant 0 : index
    %62 = vector.load %arg9[%c0_29, %c0_30] : memref<1x128xf32, #tpu.memory_space<vmem>>, vector<1x128xf32>
    %cst_31 = arith.constant dense<0.000000e+00> : vector<8xf32>
    %63 = vector.multi_reduction <add>, %60, %cst_31 [1] : vector<8x128xf32> to vector<8xf32>
    %64 = vector.shape_cast %63 : vector<8xf32> to vector<8x1xf32>
    %65 = arith.mulf %60, %60 : vector<8x128xf32>
    %cst_32 = arith.constant dense<0.000000e+00> : vector<8xf32>
    %66 = vector.multi_reduction <add>, %65, %cst_32 [1] : vector<8x128xf32> to vector<8xf32>
    %67 = vector.shape_cast %66 : vector<8xf32> to vector<8x1xf32>
    %cst_33 = arith.constant 1.562500e-02 : f32
    %68 = vector.broadcast %cst_33 : f32 to vector<8x1xf32>
    %69 = arith.mulf %64, %68 : vector<8x1xf32>
    %cst_34 = arith.constant 1.562500e-02 : f32
    %70 = vector.broadcast %cst_34 : f32 to vector<8x1xf32>
    %71 = arith.mulf %67, %70 : vector<8x1xf32>
    %72 = arith.mulf %69, %69 : vector<8x1xf32>
    %73 = arith.subf %71, %72 : vector<8x1xf32>
    %74 = vector.broadcast %69 : vector<8x1xf32> to vector<8x128xf32>
    %75 = arith.subf %60, %74 : vector<8x128xf32>
    %cst_35 = arith.constant 9.99999974E-6 : f32
    %76 = vector.broadcast %cst_35 : f32 to vector<8x1xf32>
    %77 = arith.addf %73, %76 : vector<8x1xf32>
    %78 = math.rsqrt %77 : vector<8x1xf32>
    %79 = vector.broadcast %78 : vector<8x1xf32> to vector<8x128xf32>
    %80 = arith.mulf %75, %79 : vector<8x128xf32>
    %81 = vector.broadcast %61 : vector<1x128xf32> to vector<8x128xf32>
    %82 = arith.mulf %80, %81 : vector<8x128xf32>
    %83 = vector.broadcast %62 : vector<1x128xf32> to vector<8x128xf32>
    %84 = arith.addf %82, %83 : vector<8x128xf32>
    %c0_36 = arith.constant 0 : index
    %c0_37 = arith.constant 0 : index
    %85 = vector.load %arg10[%c0_36, %c0_37] : memref<128x128xf32, #tpu.memory_space<vmem>>, vector<128x128xf32>
    %c0_38 = arith.constant 0 : index
    %c0_39 = arith.constant 0 : index
    %86 = vector.load %arg11[%c0_38, %c0_39] : memref<1x128xf32, #tpu.memory_space<vmem>>, vector<1x128xf32>
    %cst_40 = arith.constant dense<0.000000e+00> : vector<8x128xf32>
    %87 = tpu.matmul %84, %85, %cst_40 {dimension_numbers = #tpu.dot_dimension_numbers<[1], [0], [0], [1], [0, 0, 1, 1], [], []>} : vector<8x128xf32>, vector<128x128xf32>, vector<8x128xf32> -> vector<8x128xf32>
    %88 = vector.broadcast %86 : vector<1x128xf32> to vector<8x128xf32>
    %89 = arith.addf %87, %88 : vector<8x128xf32>
    %c0_41 = arith.constant 0 : index
    %c0_42 = arith.constant 0 : index
    %90 = vector.load %arg12[%c0_41, %c0_42] : memref<8x128xf32, #tpu.memory_space<vmem>>, vector<8x128xf32>
    tpu.vector_store %arg12[%c0_41, %c0_42], %89 {strides = array<i32>} : memref<8x128xf32, #tpu.memory_space<vmem>>, vector<8x128xf32>,
    return
  }
  func.func @transform_0(%arg0: i32) -> (i32, i32) {
    %c0_i32 = arith.constant 0 : i32
    %c0_i32_0 = arith.constant 0 : i32
    return %arg0, %c0_i32 : i32, i32
  }
  func.func @transform_1(%arg0: i32) -> (i32, i32) {
    %c0_i32 = arith.constant 0 : i32
    %c0_i32_0 = arith.constant 0 : i32
    %c0_i32_1 = arith.constant 0 : i32
    return %c0_i32, %c0_i32_0 : i32, i32
  }
  func.func @transform_2(%arg0: i32) -> (i32, i32) {
    %c0_i32 = arith.constant 0 : i32
    %c0_i32_0 = arith.constant 0 : i32
    %c0_i32_1 = arith.constant 0 : i32
    return %c0_i32, %c0_i32_0 : i32, i32
  }
  func.func @transform_3(%arg0: i32) -> (i32, i32) {
    %c0_i32 = arith.constant 0 : i32
    %c0_i32_0 = arith.constant 0 : i32
    %c0_i32_1 = arith.constant 0 : i32
    return %c0_i32, %c0_i32_0 : i32, i32
  }
  func.func @transform_4(%arg0: i32) -> (i32, i32) {
    %c0_i32 = arith.constant 0 : i32
    %c0_i32_0 = arith.constant 0 : i32
    %c0_i32_1 = arith.constant 0 : i32
    return %c0_i32, %c0_i32_0 : i32, i32
  }
  func.func @transform_5(%arg0: i32) -> (i32, i32) {
    %c0_i32 = arith.constant 0 : i32
    %c0_i32_0 = arith.constant 0 : i32
    %c0_i32_1 = arith.constant 0 : i32
    return %c0_i32, %c0_i32_0 : i32, i32
  }
  func.func @transform_6(%arg0: i32) -> (i32, i32) {
    %c0_i32 = arith.constant 0 : i32
    %c0_i32_0 = arith.constant 0 : i32
    %c0_i32_1 = arith.constant 0 : i32
    return %c0_i32, %c0_i32_0 : i32, i32
  }
  func.func @transform_7(%arg0: i32) -> (i32, i32) {
    %c0_i32 = arith.constant 0 : i32
    %c0_i32_0 = arith.constant 0 : i32
    %c0_i32_1 = arith.constant 0 : i32
    return %c0_i32, %c0_i32_0 : i32, i32
  }
  func.func @transform_8(%arg0: i32) -> (i32, i32) {
    %c0_i32 = arith.constant 0 : i32
    %c0_i32_0 = arith.constant 0 : i32
    %c0_i32_1 = arith.constant 0 : i32
    return %c0_i32, %c0_i32_0 : i32, i32
  }
  func.func @transform_9(%arg0: i32) -> (i32, i32) {
    %c0_i32 = arith.constant 0 : i32
    %c0_i32_0 = arith.constant 0 : i32
    %c0_i32_1 = arith.constant 0 : i32
    return %c0_i32, %c0_i32_0 : i32, i32
  }
  func.func @transform_10(%arg0: i32) -> (i32, i32) {
    %c0_i32 = arith.constant 0 : i32
    %c0_i32_0 = arith.constant 0 : i32
    %c0_i32_1 = arith.constant 0 : i32
    return %c0_i32, %c0_i32_0 : i32, i32
  }
  func.func @transform_11(%arg0: i32) -> (i32, i32) {
    %c0_i32 = arith.constant 0 : i32
    %c0_i32_0 = arith.constant 0 : i32
    return %arg0, %c0_i32 : i32, i32
  }
}

</mosaic_0001>

<llo_original>
// kernel: tpu_custom_call.1
$region0: #{tpu_custom_call.1}
  #allocation0 [shape = 'u32[]', space=smem, size = 0x4, offset = 0x4, fixed_abs, tag = 'smem constant byte address 0x4 - core index']
  #allocation1 [shape = 'u32[72,128]{1,0:T(1,128)}', space=vmem, size = 0x9000, scoped, tag = 'internal scratch']
  %s0 = inlined_call_operand.hbm [shape: f32[8,128], index: 0, kind: input, shape index: {}]
  %s1 = inlined_call_operand.hbm [shape: f32[128,128], index: 1, kind: input, shape index: {}]
  %s2 = inlined_call_operand.vmem [shape: f32[1,128], index: 2, kind: input, shape index: {}]
  %s3 = inlined_call_operand.vmem [shape: f32[1,128], index: 3, kind: input, shape index: {}]
  %s4 = inlined_call_operand.vmem [shape: f32[1,128], index: 4, kind: input, shape index: {}]
  %s5 = inlined_call_operand.hbm [shape: f32[128,128], index: 5, kind: input, shape index: {}]
  %s6 = inlined_call_operand.vmem [shape: f32[1,128], index: 6, kind: input, shape index: {}]
  %s7 = inlined_call_operand.vmem [shape: f32[1,128], index: 7, kind: input, shape index: {}]
  %s8 = inlined_call_operand.vmem [shape: f32[1,128], index: 8, kind: input, shape index: {}]
  %s9 = inlined_call_operand.hbm [shape: f32[128,128], index: 9, kind: input, shape index: {}]
  %s10 = inlined_call_operand.vmem [shape: f32[1,128], index: 10, kind: input, shape index: {}]
  %s11 = inlined_call_operand.hbm [shape: f32[8,128], index: 11, kind: output, shape index: {}]
  %s12 = sld [smem:[#allocation0]]
  $region70: #{tpu_custom_call.1} parent=0
    _
  %s14 = ssub.s32 1, %s12
  %s15 = scalar_select 0, %s14, %s12
  $region1: #{tpu_custom_call.1} parent=0
    #allocation2 [shape = 'u8[4096]{0}', space=vmem, size = 0x1000, scoped, tag = 'input window, operand 0, single buffered']
    #allocation3 [shape = 's32[1]{0}', space=sflag, size = 0x4, scoped, tag = 'scoped memory for tpu_custom_call.1']
    #allocation4 [shape = 's32[1]{0}', space=sflag, size = 0x4, scoped, tag = 'scoped memory for tpu_custom_call.1']
    #allocation5 [shape = 'u8[65536]{0}', space=vmem, size = 0x10000, scoped, tag = 'input window, operand 1, single buffered']
    #allocation6 [shape = 's32[1]{0}', space=sflag, size = 0x4, scoped, tag = 'scoped memory for tpu_custom_call.1']
    #allocation7 [shape = 'u8[65536]{0}', space=vmem, size = 0x10000, scoped, tag = 'input window, operand 5, single buffered']
    #allocation8 [shape = 'u8[65536]{0}', space=vmem, size = 0x10000, scoped, tag = 'input window, operand 9, single buffered']
    #allocation9 [shape = 's32[1]{0}', space=sflag, size = 0x4, scoped, tag = 'scoped memory for tpu_custom_call.1']
    #allocation10 [shape = 'u8[4096]{0}', space=vmem, size = 0x1000, scoped, tag = 'output window, operand 0, single buffered']
    %16 = vsyncpa [#allocation3], 0
    %17 = vsyncpa [#allocation6], 0
    %18 = vsyncpa [#allocation9], 0
    %19 = vsyncpa [#allocation4], 0
    // Predicated region
    $region2: #{tpu_custom_call.1} parent=1 // pred_check
      _
    $region3: #{tpu_custom_call.1} parent=1 // pred_check_branch
      %21 = sbr.rel (0) target = $region5
    $region4: #{tpu_custom_call.1} parent=1 // pred_region
      %23 = vsyncadd [#allocation3], 0
      %s25 = sshll.u32 %s0, 4
      %s26 = int_to_ptr.hbm [resolvable:$true] %s25
      %s27 = sshll.u32 [#allocation2], 4
      %s28 = int_to_ptr.vmem [resolvable:$true] %s27
      %30 = dma.hbm_to_vmem [thread:$0]  %s26, 128, %s28, [#allocation3]
    $region5: #{tpu_custom_call.1} parent=1 // pred_fallthru
      _
    // Predicated region
    $region6: #{tpu_custom_call.1} parent=1 // pred_check
      _
    $region7: #{tpu_custom_call.1} parent=1 // pred_check_branch
      %32 = sbr.rel (0) target = $region9
    $region8: #{tpu_custom_call.1} parent=1 // pred_region
      %34 = vsyncadd [#allocation6], 0
      %s35 = sshll.u32 %s1, 4
      %s36 = int_to_ptr.hbm [resolvable:$true] %s35
      %s37 = sshll.u32 [#allocation5], 4
      %s38 = int_to_ptr.vmem [resolvable:$true] %s37
      %43 = dma.hbm_to_vmem [thread:$0]  %s36, 2048, %s38, [#allocation6], 128, 128, 8
    $region9: #{tpu_custom_call.1} parent=1 // pred_fallthru
      _
    // Predicated region
    $region10: #{tpu_custom_call.1} parent=1 // pred_check
      _
    $region11: #{tpu_custom_call.1} parent=1 // pred_check_branch
      %45 = sbr.rel (0) target = $region13
    $region12: #{tpu_custom_call.1} parent=1 // pred_region
      _
    $region13: #{tpu_custom_call.1} parent=1 // pred_fallthru
      _
    // Predicated region
    $region14: #{tpu_custom_call.1} parent=1 // pred_check
      _
    $region15: #{tpu_custom_call.1} parent=1 // pred_check_branch
      %47 = sbr.rel (0) target = $region17
    $region16: #{tpu_custom_call.1} parent=1 // pred_region
      _
    $region17: #{tpu_custom_call.1} parent=1 // pred_fallthru
      _
    // Predicated region
    $region18: #{tpu_custom_call.1} parent=1 // pred_check
      _
    $region19: #{tpu_custom_call.1} parent=1 // pred_check_branch
      %49 = sbr.rel (0) target = $region21
    $region20: #{tpu_custom_call.1} parent=1 // pred_region
      _
    $region21: #{tpu_custom_call.1} parent=1 // pred_fallthru
      _
    // Predicated region
    $region22: #{tpu_custom_call.1} parent=1 // pred_check
      _
    $region23: #{tpu_custom_call.1} parent=1 // pred_check_branch
      %51 = sbr.rel (0) target = $region25
    $region24: #{tpu_custom_call.1} parent=1 // pred_region
      %53 = vsyncadd [#allocation6], 0
      %s54 = sshll.u32 %s5, 4
      %s55 = int_to_ptr.hbm [resolvable:$true] %s54
      %s56 = sshll.u32 [#allocation7], 4
      %s57 = int_to_ptr.vmem [resolvable:$true] %s56
      %62 = dma.hbm_to_vmem [thread:$0]  %s55, 2048, %s57, [#allocation6], 128, 128, 8
    $region25: #{tpu_custom_call.1} parent=1 // pred_fallthru
      _
    // Predicated region
    $region26: #{tpu_custom_call.1} parent=1 // pred_check
      _
    $region27: #{tpu_custom_call.1} parent=1 // pred_check_branch
      %64 = sbr.rel (0) target = $region29
    $region28: #{tpu_custom_call.1} parent=1 // pred_region
      _
    $region29: #{tpu_custom_call.1} parent=1 // pred_fallthru
      _
    // Predicated region
    $region30: #{tpu_custom_call.1} parent=1 // pred_check
      _
    $region31: #{tpu_custom_call.1} parent=1 // pred_check_branch
      %66 = sbr.rel (0) target = $region33
    $region32: #{tpu_custom_call.1} parent=1 // pred_region
      _
    $region33: #{tpu_custom_call.1} parent=1 // pred_fallthru
      _
    // Predicated region
    $region34: #{tpu_custom_call.1} parent=1 // pred_check
      _
    $region35: #{tpu_custom_call.1} parent=1 // pred_check_branch
      %68 = sbr.rel (0) target = $region37
    $region36: #{tpu_custom_call.1} parent=1 // pred_region
      _
    $region37: #{tpu_custom_call.1} parent=1 // pred_fallthru
      _
    // Predicated region
    $region38: #{tpu_custom_call.1} parent=1 // pred_check
      _
    $region39: #{tpu_custom_call.1} parent=1 // pred_check_branch
      %70 = sbr.rel (0) target = $region41
    $region40: #{tpu_custom_call.1} parent=1 // pred_region
      %72 = vsyncadd [#allocation9], 0
      %s73 = sshll.u32 %s9, 4
      %s74 = int_to_ptr.hbm [resolvable:$true] %s73
      %s75 = sshll.u32 [#allocation8], 4
      %s76 = int_to_ptr.vmem [resolvable:$true] %s75
      %81 = dma.hbm_to_vmem [thread:$0]  %s74, 2048, %s76, [#allocation9], 128, 128, 8
    $region41: #{tpu_custom_call.1} parent=1 // pred_fallthru
      _
    // Predicated region
    $region42: #{tpu_custom_call.1} parent=1 // pred_check
      _
    $region43: #{tpu_custom_call.1} parent=1 // pred_check_branch
      %83 = sbr.rel (0) target = $region45
    $region44: #{tpu_custom_call.1} parent=1 // pred_region
      _
    $region45: #{tpu_custom_call.1} parent=1 // pred_fallthru
      _
    // Predicated region
    $region46: #{tpu_custom_call.1} parent=1 // pred_check
      _
    $region47: #{tpu_custom_call.1} parent=1 // pred_check_branch
      %85 = sbr.rel (0) target = $region49
    $region48: #{tpu_custom_call.1} parent=1 // pred_region
      %87 = dma.done [#allocation3], 128
    $region49: #{tpu_custom_call.1} parent=1 // pred_fallthru
      _
    // Predicated region
    $region50: #{tpu_custom_call.1} parent=1 // pred_check
      _
    $region51: #{tpu_custom_call.1} parent=1 // pred_check_branch
      %89 = sbr.rel (0) target = $region53
    $region52: #{tpu_custom_call.1} parent=1 // pred_region
      %91 = dma.done [#allocation6], 2048
    $region53: #{tpu_custom_call.1} parent=1 // pred_fallthru
      _
    // Predicated region
    $region54: #{tpu_custom_call.1} parent=1 // pred_check
      _
    $region55: #{tpu_custom_call.1} parent=1 // pred_check_branch
      %93 = sbr.rel (0) target = $region57
    $region56: #{tpu_custom_call.1} parent=1 // pred_region
      %95 = dma.done [#allocation6], 2048
    $region57: #{tpu_custom_call.1} parent=1 // pred_fallthru
      _
    // Predicated region
    $region58: #{tpu_custom_call.1} parent=1 // pred_check
      _
    $region59: #{tpu_custom_call.1} parent=1 // pred_check_branch
      %97 = sbr.rel (0) target = $region61
    $region60: #{tpu_custom_call.1} parent=1 // pred_region
      %99 = dma.done [#allocation9], 2048
    $region61: #{tpu_custom_call.1} parent=1 // pred_fallthru
      _
    %v100 = vld [vmem:[#allocation2] sm:$0xff]
    %v101 = vld [vmem:[#allocation5] sm:$0xff]
    %v102 = vld [vmem:[#allocation5 + $0x8] sm:$0xff]
    %v103 = vld [vmem:[#allocation5 + $0x10] sm:$0xff]
    %v104 = vld [vmem:[#allocation5 + $0x18] sm:$0xff]
    %v105 = vld [vmem:[#allocation5 + $0x20] sm:$0xff]
    %v106 = vld [vmem:[#allocation5 + $0x28] sm:$0xff]
    %v107 = vld [vmem:[#allocation5 + $0x30] sm:$0xff]
    %v108 = vld [vmem:[#allocation5 + $0x38] sm:$0xff]
    %v109 = vld [vmem:[#allocation5 + $0x40] sm:$0xff]
    %v110 = vld [vmem:[#allocation5 + $0x48] sm:$0xff]
    %v111 = vld [vmem:[#allocation5 + $0x50] sm:$0xff]
    %v112 = vld [vmem:[#allocation5 + $0x58] sm:$0xff]
    %v113 = vld [vmem:[#allocation5 + $0x60] sm:$0xff]
    %v114 = vld [vmem:[#allocation5 + $0x68] sm:$0xff]
    %v115 = vld [vmem:[#allocation5 + $0x70] sm:$0xff]
    %v116 = vld [vmem:[#allocation5 + $0x78] sm:$0xff]
    %v117 = vld [vmem:[%s2] sm:$0x1]
    %v119 = vperm.slane %v117, 0
    %121 = vmatpush.msra.mxu0 %v116
    %122 = vmatpush.msra.mxu0 %v115
    %123 = vmatpush.msra.mxu0 %v114
    %124 = vmatpush.msra.mxu0 %v113
    %125 = vmatpush.msra.mxu0 %v112
    %126 = vmatpush.msra.mxu0 %v111
    %127 = vmatpush.msra.mxu0 %v110
    %128 = vmatpush.msra.mxu0 %v109
    %129 = vmatpush.msra.mxu0 %v108
    %130 = vmatpush.msra.mxu0 %v107
    %131 = vmatpush.msra.mxu0 %v106
    %132 = vmatpush.msra.mxu0 %v105
    %133 = vmatpush.msra.mxu0 %v104
    %134 = vmatpush.msra.mxu0 %v103
    %135 = vmatpush.msra.mxu0 %v102
    %136 = vmatpush.msra.mxu0 %v101
    %137 = vmatmul.f32.gmra.mxu0 %v100
    %v138 = vpop.f32.mrf.mxu0
    %v139 = vadd.f32 %v119, %v138
    %140 = vdwg.mxu0
    %v141 = vmul.f32 %v139, 0.5
    %v142 = vmul.f32 %v139, 0.044715
    %v143 = vmul.f32 %v142, %v139
    %v144 = vmul.f32 %v143, %v139
    %v145 = vadd.f32 %v139, %v144
    %v146 = vmul.f32 %v145, 0.7978846
    %v147 = vtanh.pop %v146
    %v148 = vadd.f32 %v147, 1.0
    %v149 = vmul.f32 %v141, %v148
    %v150 = vld [vmem:[%s3] sm:$0x1]
    %v151 = vld [vmem:[%s4] sm:$0x1]
    %152 = vadd.xlane.f32.xlu0 %v149
    %v153 = vpop.xlane.xlu0 %152
    %v154 = vmul.f32 %v149, %v149
    %155 = vadd.xlane.f32.xlu0 %v154
    %v156 = vpop.xlane.xlu0 %155
    %v157 = vmul.f32 %v153, 0.015625
    %v158 = vmul.f32 %v156, 0.015625
    %v159 = vmul.f32 %v157, %v157
    %v160 = vsub.f32 %v158, %v159
    %v161 = vsub.f32 %v149, %v157
    %v162 = vadd.f32 %v160, 1e-05
    %v163 = vrsqrt.pop %v162
    %v164 = vmul.f32 %v163, %v162
    %v165 = vmul.f32 %v164, %v163
    %v166 = vmul.f32 0.5, %v165
    %v167 = vsub.f32 1.5, %v166
    %v168 = vmul.f32 %v163, %v167
    %vm169 = vweird.f32 %v162
    %vm170 = vweird.f32 %v163
    %vm171 = vmor %vm169, %vm170
    %v172 = vsel %vm171, %v163, %v168
    %v173 = vmul.f32 %v161, %v172
    %v175 = vperm.slane %v150, 0
    %v177 = vmul.f32 %v173, %v175
    %v179 = vperm.slane %v151, 0
    %v181 = vadd.f32 %v177, %v179
    %v182 = vld [vmem:[#allocation7] sm:$0xff]
    %v183 = vld [vmem:[#allocation7 + $0x8] sm:$0xff]
    %v184 = vld [vmem:[#allocation7 + $0x10] sm:$0xff]
    %v185 = vld [vmem:[#allocation7 + $0x18] sm:$0xff]
    %v186 = vld [vmem:[#allocation7 + $0x20] sm:$0xff]
    %v187 = vld [vmem:[#allocation7 + $0x28] sm:$0xff]
    %v188 = vld [vmem:[#allocation7 + $0x30] sm:$0xff]
    %v189 = vld [vmem:[#allocation7 + $0x38] sm:$0xff]
    %v190 = vld [vmem:[#allocation7 + $0x40] sm:$0xff]
    %v191 = vld [vmem:[#allocation7 + $0x48] sm:$0xff]
    %v192 = vld [vmem:[#allocation7 + $0x50] sm:$0xff]
    %v193 = vld [vmem:[#allocation7 + $0x58] sm:$0xff]
    %v194 = vld [vmem:[#allocation7 + $0x60] sm:$0xff]
    %v195 = vld [vmem:[#allocation7 + $0x68] sm:$0xff]
    %v196 = vld [vmem:[#allocation7 + $0x70] sm:$0xff]
    %v197 = vld [vmem:[#allocation7 + $0x78] sm:$0xff]
    %v198 = vld [vmem:[%s6] sm:$0x1]
    %v200 = vperm.slane %v198, 0
    %202 = vmatpush.msra.mxu0 %v197
    %203 = vmatpush.msra.mxu0 %v196
    %204 = vmatpush.msra.mxu0 %v195
    %205 = vmatpush.msra.mxu0 %v194
    %206 = vmatpush.msra.mxu0 %v193
    %207 = vmatpush.msra.mxu0 %v192
    %208 = vmatpush.msra.mxu0 %v191
    %209 = vmatpush.msra.mxu0 %v190
    %210 = vmatpush.msra.mxu0 %v189
    %211 = vmatpush.msra.mxu0 %v188
    %212 = vmatpush.msra.mxu0 %v187
    %213 = vmatpush.msra.mxu0 %v186
    %214 = vmatpush.msra.mxu0 %v185
    %215 = vmatpush.msra.mxu0 %v184
    %216 = vmatpush.msra.mxu0 %v183
    %217 = vmatpush.msra.mxu0 %v182
    %218 = vmatmul.f32.gmra.mxu0 %v181
    %v219 = vpop.f32.mrf.mxu0
    %v220 = vadd.f32 %v200, %v219
    %221 = vdwg.mxu0
    %v222 = vmul.f32 %v220, 0.5
    %v223 = vmul.f32 %v220, 0.044715
    %v224 = vmul.f32 %v223, %v220
    %v225 = vmul.f32 %v224, %v220
    %v226 = vadd.f32 %v220, %v225
    %v227 = vmul.f32 %v226, 0.7978846
    %v228 = vtanh.pop %v227
    %v229 = vadd.f32 %v228, 1.0
    %v230 = vmul.f32 %v222, %v229
    %v231 = vld [vmem:[%s7] sm:$0x1]
    %v232 = vld [vmem:[%s8] sm:$0x1]
    %233 = vadd.xlane.f32.xlu0 %v230
    %v234 = vpop.xlane.xlu0 %233
    %v235 = vmul.f32 %v230, %v230
    %236 = vadd.xlane.f32.xlu0 %v235
    %v237 = vpop.xlane.xlu0 %236
    %v238 = vmul.f32 %v234, 0.015625
    %v239 = vmul.f32 %v237, 0.015625
    %v240 = vmul.f32 %v238, %v238
    %v241 = vsub.f32 %v239, %v240
    %v242 = vsub.f32 %v230, %v238
    %v243 = vadd.f32 %v241, 1e-05
    %v244 = vrsqrt.pop %v243
    %v245 = vmul.f32 %v244, %v243
    %v246 = vmul.f32 %v245, %v244
    %v247 = vmul.f32 0.5, %v246
    %v248 = vsub.f32 1.5, %v247
    %v249 = vmul.f32 %v244, %v248
    %vm250 = vweird.f32 %v243
    %vm251 = vweird.f32 %v244
    %vm252 = vmor %vm250, %vm251
    %v253 = vsel %vm252, %v244, %v249
    %v254 = vmul.f32 %v242, %v253
    %v256 = vperm.slane %v231, 0
    %v258 = vmul.f32 %v254, %v256
    %v260 = vperm.slane %v232, 0
    %v262 = vadd.f32 %v258, %v260
    %v263 = vld [vmem:[#allocation8] sm:$0xff]
    %v264 = vld [vmem:[#allocation8 + $0x8] sm:$0xff]
    %v265 = vld [vmem:[#allocation8 + $0x10] sm:$0xff]
    %v266 = vld [vmem:[#allocation8 + $0x18] sm:$0xff]
    %v267 = vld [vmem:[#allocation8 + $0x20] sm:$0xff]
    %v268 = vld [vmem:[#allocation8 + $0x28] sm:$0xff]
    %v269 = vld [vmem:[#allocation8 + $0x30] sm:$0xff]
    %v270 = vld [vmem:[#allocation8 + $0x38] sm:$0xff]
    %v271 = vld [vmem:[#allocation8 + $0x40] sm:$0xff]
    %v272 = vld [vmem:[#allocation8 + $0x48] sm:$0xff]
    %v273 = vld [vmem:[#allocation8 + $0x50] sm:$0xff]
    %v274 = vld [vmem:[#allocation8 + $0x58] sm:$0xff]
    %v275 = vld [vmem:[#allocation8 + $0x60] sm:$0xff]
    %v276 = vld [vmem:[#allocation8 + $0x68] sm:$0xff]
    %v277 = vld [vmem:[#allocation8 + $0x70] sm:$0xff]
    %v278 = vld [vmem:[#allocation8 + $0x78] sm:$0xff]
    %v279 = vld [vmem:[%s10] sm:$0x1]
    %v281 = vperm.slane %v279, 0
    %283 = vmatpush.msra.mxu0 %v278
    %284 = vmatpush.msra.mxu0 %v277
    %285 = vmatpush.msra.mxu0 %v276
    %286 = vmatpush.msra.mxu0 %v275
    %287 = vmatpush.msra.mxu0 %v274
    %288 = vmatpush.msra.mxu0 %v273
    %289 = vmatpush.msra.mxu0 %v272
    %290 = vmatpush.msra.mxu0 %v271
    %291 = vmatpush.msra.mxu0 %v270
    %292 = vmatpush.msra.mxu0 %v269
    %293 = vmatpush.msra.mxu0 %v268
    %294 = vmatpush.msra.mxu0 %v267
    %295 = vmatpush.msra.mxu0 %v266
    %296 = vmatpush.msra.mxu0 %v265
    %297 = vmatpush.msra.mxu0 %v264
    %298 = vmatpush.msra.mxu0 %v263
    %299 = vmatmul.f32.gmra.mxu0 %v262
    %v300 = vpop.f32.mrf.mxu0
    %v301 = vadd.f32 %v281, %v300
    %302 = vdwg.mxu0
    %303 = vst [vmem:[#allocation10] sm:$0xff] %v301
    // Predicated region
    $region62: #{tpu_custom_call.1} parent=1 // pred_check
      _
    $region63: #{tpu_custom_call.1} parent=1 // pred_check_branch
      %305 = sbr.rel (0) target = $region65
    $region64: #{tpu_custom_call.1} parent=1 // pred_region
      %307 = vsyncadd [#allocation4], 0
      %s309 = sshll.u32 [#allocation10], 4
      %s310 = int_to_ptr.vmem [resolvable:$true] %s309
      %s311 = sshll.u32 %s11, 4
      %s312 = int_to_ptr.hbm [resolvable:$true] %s311
      %314 = dma.vmem_to_hbm [thread:$0]  %s310, 128, %s312, [#allocation4]
    $region65: #{tpu_custom_call.1} parent=1 // pred_fallthru
      _
    // Predicated region
    $region66: #{tpu_custom_call.1} parent=1 // pred_check
      _
    $region67: #{tpu_custom_call.1} parent=1 // pred_check_branch
      %316 = sbr.rel (0) target = $region69
    $region68: #{tpu_custom_call.1} parent=1 // pred_region
      %318 = dma.done [#allocation4], 128
    $region69: #{tpu_custom_call.1} parent=1 // pred_fallthru
      _
    %319 = vsyncpa [#allocation3], 1
    %320 = vsyncpa [#allocation6], 1
    %321 = vsyncpa [#allocation9], 1
    %322 = vsyncpa [#allocation4], 1

</llo_original>
